<compile_context>
chip_gen: v6e
topology: v6e:2x2x1
jax: 0.10.0
libtpu: 0.0.40
codegen_flags: <defaults>
</compile_context>

<pallas_src>
import functools

import jax
import jax.numpy as jnp
import numpy as np
from jax.experimental import pallas as pl
from jax.experimental.pallas import tpu as pltpu

K1, PAD1 = 5, 2          # first conv / shortcut kernel size, padding
K2, PAD2 = 3, 1          # second conv kernel size, padding
NEG_SLOPE = 0.01         # LeakyReLU slope


# --------------------------------------------------------------------------
# pltpu.roll direction probe (run once).  The kernel needs
# out[:, p] = x[:, (p + s) % lanes]; probing makes the shift sign robust to
# the rotate convention of the lowering.
# --------------------------------------------------------------------------
@functools.lru_cache(maxsize=None)
def _roll_shift_sign():
    """+1 if pltpu.roll matches np.roll (out[i] = in[(i - shift) % n]), else -1."""
    def probe(x_ref, o_ref):
        o_ref[...] = pltpu.roll(x_ref[...], 1, axis=1)

    lanes = 256
    x = jnp.tile(jax.lax.iota(jnp.float32, lanes)[None, :], (8, 1))
    y = pl.pallas_call(
        probe, out_shape=jax.ShapeDtypeStruct((8, lanes), jnp.float32))(x)
    first = int(np.asarray(jax.block_until_ready(y))[0, 0])
    if first == lanes - 1:
        return 1
    if first == 1:
        return -1
    raise AssertionError(f"unexpected pltpu.roll semantics (out[0]={first})")


# ----------------------------- Pallas kernel --------------------------------
def upb_kernel(x_ref, wcat_ref, bcat_ref, w2_ref, b2_ref, mask5_ref, mask3_ref,
               out_ref, p1_ref, p2_ref, *, W, cin_pad, cout, roll_sign):
    # x_ref    : (cin_pad, lanes) f32   b_blk unpooled images side-by-side on lanes
    # wcat_ref : (2*cout, 25*cin_pad)   [conv1 ; shortcut] 5x5 weights (MXU dtype)
    # bcat_ref : (2*cout, 1)      f32
    # w2_ref   : (cout, 9*cout)         3x3 weights (MXU dtype)
    # b2_ref   : (cout, 1)        f32
    # mask5/3  : (K*K, lanes)     f32   per-tap zero-padding masks (tiled per image)
    # out_ref  : (cout, lanes)    f32
    # p1/p2_ref: VMEM scratch im2col matrices (MXU dtype)
    lanes = x_ref.shape[-1]

    def tap(v, s):
        """Columns shifted so lane p holds v[:, p + s]; borders masked by caller."""
        shift = (-roll_sign * s) % lanes
        return v if shift == 0 else pltpu.roll(v, shift, axis=1)

    x = x_ref[...]                                            # (cin_pad, lanes) f32

    # 5x5 im2col -> VMEM scratch: one XLU roll + one VPU mask-mul per tap,
    # stored at an 8-row-aligned offset (unmasked vector stores).
    for dh in range(K1):
        for dw in range(K1):
            t = dh * K1 + dw
            s = (dh - PAD1) * W + (dw - PAD1)
            blk = tap(x, s) * mask5_ref[t:t + 1, :]
            p1_ref[t * cin_pad:(t + 1) * cin_pad, :] = blk.astype(p1_ref.dtype)

    # Main 5x5 conv + 5x5 shortcut fused into ONE matmul (2*cout output rows).
    big = jnp.dot(wcat_ref[...], p1_ref[...],
                  preferred_element_type=jnp.float32) + bcat_ref[...]
    f_pre = big[:cout, :]
    shortcut = big[cout:, :]
    act = jnp.where(f_pre > 0, f_pre, NEG_SLOPE * f_pre)      # LeakyReLU (f32)

    # 3x3 im2col of the activation -> second scratch, second single matmul.
    for dh in range(K2):
        for dw in range(K2):
            t = dh * K2 + dw
            s = (dh - PAD2) * W + (dw - PAD2)
            blk = tap(act, s) * mask3_ref[t:t + 1, :]
            p2_ref[t * cout:(t + 1) * cout, :] = blk.astype(p2_ref.dtype)

    conv2 = jnp.dot(w2_ref[...], p2_ref[...],
                    preferred_element_type=jnp.float32) + b2_ref[...]

    out_ref[...] = (shortcut + conv2).astype(out_ref.dtype)


# ------------------------------- wrappers ------------------------------------
def _border_masks(H, W, ksize, pad, reps):
    """Per-tap {0,1} validity masks (zero padding), flattened over (H, W) and
    tiled `reps` times along lanes (one copy per image in the lane block)."""
    S = H * W
    rows = np.arange(S) // W
    cols = np.arange(S) % W
    m = np.zeros((ksize * ksize, S), np.float32)
    for dh in range(ksize):
        for dw in range(ksize):
            r = rows + dh - pad
            c = cols + dw - pad
            m[dh * ksize + dw] = (r >= 0) & (r < H) & (c >= 0) & (c < W)
    return jnp.asarray(np.tile(m, (1, reps)))


def _unpool_channel_major(x, indices, cin_pad):
    """nn.MaxUnpool2d(kernel_size=2, stride=2) as a structured 2x2 one-hot
    select + interleave (no scatter).  Returns the unpooled images
    channel-major with the spatial plane flattened row-major: (cin_pad, N*S)."""
    N, C, Hp, Wp = x.shape
    if cin_pad > C:
        x = jnp.pad(x, ((0, 0), (0, cin_pad - C), (0, 0), (0, 0)))
        indices = jnp.pad(indices, ((0, 0), (0, cin_pad - C), (0, 0), (0, 0)))
    Wo = 2 * Wp
    # Max-pool indices are flat offsets into the (2H, 2W) plane and lie inside
    # their own 2x2 window, so only the two parity bits matter.
    dh = (indices // Wo) % 2
    dw = indices % 2
    x_cm = jnp.transpose(x, (1, 0, 2, 3))           # (C, N, Hp, Wp) -- pooled size
    dh_cm = jnp.transpose(dh, (1, 0, 2, 3))
    dw_cm = jnp.transpose(dw, (1, 0, 2, 3))
    a2 = jnp.arange(2, dtype=indices.dtype)
    sel = ((dh_cm[:, :, :, None, :, None] == a2[None, None, None, :, None, None]) &
           (dw_cm[:, :, :, None, :, None] == a2[None, None, None, None, None, :]))
    u = x_cm[:, :, :, None, :, None] * sel.astype(x.dtype)   # (C, N, Hp, 2, Wp, 2)
    return u.reshape(x.shape[1], -1)                # free reshape, (2H,2W) row-major


def upb_pallas(x, indices, params, *, mxu_dtype=jnp.bfloat16):
    """UPB forward.  x, indices are the pooled inputs of MaxUnpool2d (NCHW)."""
    w1, b1, w2, b2, ws, bs = params
    N, Cin, Hp, Wp = x.shape
    Cout = w1.shape[-1]
    Ho, Wo = 2 * Hp, 2 * Wp
    S = Ho * Wo
    assert Cout % 8 == 0 and S % 128 == 0, "kernel assumes Cout%8==0 and S%128==0"

    cin_pad = max(8, -(-Cin // 8) * 8)              # full-sublane-tile tap blocks

    # MaxUnpool2d(2,2) without a scatter, produced directly channel-major.
    u_flat = _unpool_channel_major(x, indices, cin_pad)       # (cin_pad, N*S) f32

    # Lay b_blk images side-by-side on the lane axis per grid step so the
    # matmul RHS is (K, b_blk*S) and per-step overhead is amortized.
    b_blk = N
    while b_blk > 1 and (N % b_blk or b_blk * S > 4096):
        b_blk -= 1
    lanes = b_blk * S

    def prep5(w):    # HWIO (5,5,Cin,Cout) -> (Cout, 25*cin_pad), tap-major rows
        w = jnp.pad(w, ((0, 0), (0, 0), (0, cin_pad - Cin), (0, 0)))
        return jnp.transpose(w, (3, 0, 1, 2)).reshape(Cout, K1 * K1 * cin_pad)

    wcat = jnp.concatenate([prep5(w1), prep5(ws)], 0).astype(mxu_dtype)
    bcat = jnp.concatenate([b1, bs]).reshape(2 * Cout, 1).astype(jnp.float32)
    w2m = (jnp.transpose(w2, (3, 0, 1, 2))
           .reshape(Cout, K2 * K2 * Cout).astype(mxu_dtype))
    b2r = b2.reshape(Cout, 1).astype(jnp.float32)

    mask5 = _border_masks(Ho, Wo, K1, PAD1, b_blk)            # (25, lanes) f32
    mask3 = _border_masks(Ho, Wo, K2, PAD2, b_blk)            # (9,  lanes) f32

    kernel = functools.partial(upb_kernel, W=Wo, cin_pad=cin_pad, cout=Cout,
                               roll_sign=_roll_shift_sign())

    out_cm = pl.pallas_call(
        kernel,
        out_shape=jax.ShapeDtypeStruct((Cout, N * S), jnp.float32),
        grid_spec=pltpu.PrefetchScalarGridSpec(
            num_scalar_prefetch=0,
            grid=(N // b_blk,),
            in_specs=[
                pl.BlockSpec((cin_pad, lanes), lambda g: (0, g)),
                pl.BlockSpec((2 * Cout, K1 * K1 * cin_pad), lambda g: (0, 0)),
                pl.BlockSpec((2 * Cout, 1), lambda g: (0, 0)),
                pl.BlockSpec((Cout, K2 * K2 * Cout), lambda g: (0, 0)),
                pl.BlockSpec((Cout, 1), lambda g: (0, 0)),
                pl.BlockSpec((K1 * K1, lanes), lambda g: (0, 0)),
                pl.BlockSpec((K2 * K2, lanes), lambda g: (0, 0)),
            ],
            out_specs=pl.BlockSpec((Cout, lanes), lambda g: (0, g)),
            scratch_shapes=[
                pltpu.VMEM((K1 * K1 * cin_pad, lanes), mxu_dtype),   # p1 im2col
                pltpu.VMEM((K2 * K2 * Cout, lanes), mxu_dtype),      # p2 im2col
            ]),
        compiler_params=pltpu.CompilerParams(
            dimension_semantics=("parallel",)),
    )(u_flat, wcat, bcat, w2m, b2r, mask5, mask3)

    # channel-major -> NCHW (free reshape + one small output transpose)
    return out_cm.reshape(Cout, N, Ho, Wo).transpose(1, 0, 2, 3)


# --------------------------- pure-JAX reference -------------------------------
def _max_unpool2d_ref(x, indices):
    """Scatter-based MaxUnpool2d(2,2) reference (reference path only)."""
    N, C, H, W = x.shape
    out = jnp.zeros((N, C, 4 * H * W), x.dtype)
    ni = jnp.arange(N)[:, None, None]
    ci = jnp.arange(C)[None, :, None]
    out = out.at[ni, ci, indices.reshape(N, C, H * W)].set(x.reshape(N, C, H * W))
    return out.reshape(N, C, 2 * H, 2 * W)


def _conv_ref(x_nhwc, w_hwio, b, pad):
    y = jax.lax.conv_general_dilated(
        x_nhwc, w_hwio, window_strides=(1, 1),
        padding=[(pad, pad), (pad, pad)],
        dimension_numbers=('NHWC', 'HWIO', 'NHWC'),
        precision=jax.lax.Precision.HIGHEST)
    return y + b.reshape(1, 1, 1, -1)


def upb_ref(x, indices, params):
    w1, b1, w2, b2, ws, bs = params
    u = jnp.transpose(_max_unpool2d_ref(x, indices), (0, 2, 3, 1))
    i = _conv_ref(u, ws, bs, PAD1)
    f = _conv_ref(u, w1, b1, PAD1)
    f = jnp.where(f > 0, f, NEG_SLOPE * f)
    f = _conv_ref(f, w2, b2, PAD2)
    return jnp.transpose(i + f, (0, 3, 1, 2))


# --------------------------------- main ---------------------------------------
if __name__ == "__main__":
    key = jax.random.PRNGKey(0)
    N, Cin, Cout = 2, 4, 8
    Hp = Wp = 8                      # pooled spatial; unpooled -> 16x16
    ks = jax.random.split(key, 9)

    x = jax.random.normal(ks[0], (N, Cin, Hp, Wp), jnp.float32)
    # synthetic MaxPool2d(2,2) indices: flat index into the (2H, 2W) plane,
    # one element chosen inside each 2x2 window.
    rh = jax.random.randint(ks[1], (N, Cin, Hp, Wp), 0, 2)
    rw = jax.random.randint(ks[2], (N, Cin, Hp, Wp), 0, 2)
    hh = jnp.arange(Hp).reshape(1, 1, Hp, 1)
    ww = jnp.arange(Wp).reshape(1, 1, 1, Wp)
    indices = (2 * hh + rh) * (2 * Wp) + (2 * ww + rw)

    # deterministic parameter init (shapes from UPB.__init__), HWIO layout
    w1 = 0.1 * jax.random.normal(ks[3], (K1, K1, Cin, Cout), jnp.float32)
    b1 = 0.1 * jax.random.normal(ks[4], (Cout,), jnp.float32)
    w2 = 0.1 * jax.random.normal(ks[5], (K2, K2, Cout, Cout), jnp.float32)
    b2 = 0.1 * jax.random.normal(ks[6], (Cout,), jnp.float32)
    ws = 0.1 * jax.random.normal(ks[7], (K1, K1, Cin, Cout), jnp.float32)
    bs = 0.1 * jax.random.normal(ks[8], (Cout,), jnp.float32)
    params = (w1, b1, w2, b2, ws, bs)

    _roll_shift_sign()               # one-time on-device probe, outside jit

    ref = upb_ref(x, indices, params)

    # f32 MXU operands: exact conv semantics, tight tolerance.
    out_f32 = jax.jit(functools.partial(upb_pallas, mxu_dtype=jnp.float32))(
        x, indices, params)
    out_f32 = jax.block_until_ready(out_f32)
    np.testing.assert_allclose(np.asarray(out_f32), np.asarray(ref),
                               rtol=2e-3, atol=2e-3)

    # bf16 MXU operands (v6e/v7x fast path), f32 elementwise + accumulation.
    out_bf16 = jax.jit(functools.partial(upb_pallas, mxu_dtype=jnp.bfloat16))(
        x, indices, params)
    out_bf16 = jax.block_until_ready(out_bf16)
    np.testing.assert_allclose(np.asarray(out_bf16), np.asarray(ref),
                               rtol=2e-2, atol=2e-2)

    print("KERNEL_OK")
</pallas_src>

<mosaic_0001>
module attributes {stable_mosaic.version = 11 : i64} {
  func.func @probe(%arg0: memref<8x256xf32, #tpu.memory_space<vmem>>, %arg1: memref<8x256xf32, #tpu.memory_space<vmem>>) attributes {dimension_semantics = [], scalar_prefetch = 0 : i64, scratch_operands = 0 : i64, tpu.core_type = #tpu.core_type<tc>} {
    %c0 = arith.constant 0 : index
    %c0_0 = arith.constant 0 : index
    %0 = vector.load %arg0[%c0, %c0_0] : memref<8x256xf32, #tpu.memory_space<vmem>>, vector<8x256xf32>
    %c1_i32 = arith.constant 1 : i32
    %1 = tpu.dynamic_rotate %0 by %c1_i32 dim 1 : vector<8x256xf32>, i32 -> vector<8x256xf32>
    %c0_1 = arith.constant 0 : index
    %c0_2 = arith.constant 0 : index
    %2 = vector.load %arg1[%c0_1, %c0_2] : memref<8x256xf32, #tpu.memory_space<vmem>>, vector<8x256xf32>
    tpu.vector_store %arg1[%c0_1, %c0_2], %1 {strides = array<i32>} : memref<8x256xf32, #tpu.memory_space<vmem>>, vector<8x256xf32>,
    return
  }
}

</mosaic_0001>

<llo_original>
// kernel: tpu_custom_call.1
$region0: #{tpu_custom_call.1}
  #allocation0 [shape = 'u32[]', space=smem, size = 0x4, offset = 0x4, fixed_abs, tag = 'smem constant byte address 0x4 - core index']
  #allocation1 [shape = 'u32[144,128]{1,0:T(1,128)}', space=vmem, size = 0x12000, scoped, tag = 'internal scratch']
  %s0 = inlined_call_operand.hbm [shape: f32[8,256], index: 0, kind: input, shape index: {}]
  %s1 = inlined_call_operand.hbm [shape: f32[8,256], index: 1, kind: output, shape index: {}]
  %s2 = sld [smem:[#allocation0]]
  $region18: #{tpu_custom_call.1} parent=0
    _
  %s4 = ssub.s32 1, %s2
  %s5 = scalar_select 0, %s4, %s2
  $region1: #{tpu_custom_call.1} parent=0
    #allocation2 [shape = 'u8[8192]{0}', space=vmem, size = 0x2000, scoped, tag = 'input window, operand 0, single buffered']
    #allocation3 [shape = 's32[1]{0}', space=sflag, size = 0x4, scoped, tag = 'scoped memory for tpu_custom_call.1']
    #allocation4 [shape = 's32[1]{0}', space=sflag, size = 0x4, scoped, tag = 'scoped memory for tpu_custom_call.1']
    #allocation5 [shape = 'u8[8192]{0}', space=vmem, size = 0x2000, scoped, tag = 'output window, operand 0, single buffered']
    %6 = vsyncpa [#allocation3], 0
    %7 = vsyncpa [#allocation4], 0
    // Predicated region
    $region2: #{tpu_custom_call.1} parent=1 // pred_check
      _
    $region3: #{tpu_custom_call.1} parent=1 // pred_check_branch
      %9 = sbr.rel (0) target = $region5
    $region4: #{tpu_custom_call.1} parent=1 // pred_region
      %s11 = ssub.s32 256, 256
      %12 = vsyncadd [#allocation3], %s11
      %s14 = sshll.u32 [#allocation2], 4
      %s15 = int_to_ptr.vmem [resolvable:$true] %s14
      %17 = dma.hbm_to_vmem [thread:$0]  %s0, 256, %s15, [#allocation3]
    $region5: #{tpu_custom_call.1} parent=1 // pred_fallthru
      _
    // Predicated region
    $region6: #{tpu_custom_call.1} parent=1 // pred_check
      _
    $region7: #{tpu_custom_call.1} parent=1 // pred_check_branch
      %19 = sbr.rel (0) target = $region9
    $region8: #{tpu_custom_call.1} parent=1 // pred_region
      %20 = dma.done [#allocation3], 256
    $region9: #{tpu_custom_call.1} parent=1 // pred_fallthru
      _
    %v21 = vld [vmem:[#allocation2] sm:$0xff]
    %v22 = vld [vmem:[#allocation2 + $0x8] sm:$0xff]
    %23 = vrot.lane.b32.xlu0 %v21, 1
    %v24 = vpop.permute.xlu0 %23
    %25 = vrot.lane.b32.xlu0 %v22, 1
    %v26 = vpop.permute.xlu0 %25
    %v27 = vlaneseq
    %v28 = vand.u32 %v27, 127
    %vm29 = vcmp.lt.s32.totalorder %v28, 1
    %v30 = vsel %vm29, %v24, %v26
    %v31 = vsel %vm29, %v26, %v24
    %32 = vst [vmem:[#allocation5] sm:$0xff] %v31
    %33 = vst [vmem:[#allocation5 + $0x8] sm:$0xff] %v30
    // Predicated region
    $region10: #{tpu_custom_call.1} parent=1 // pred_check
      _
    $region11: #{tpu_custom_call.1} parent=1 // pred_check_branch
      %35 = sbr.rel (0) target = $region13
    $region12: #{tpu_custom_call.1} parent=1 // pred_region
      %s37 = ssub.s32 256, 256
      %38 = vsyncadd [#allocation4], %s37
      %s40 = sshll.u32 [#allocation5], 4
      %s41 = int_to_ptr.vmem [resolvable:$true] %s40
      %43 = dma.vmem_to_hbm [thread:$0]  %s41, 256, %s1, [#allocation4]
    $region13: #{tpu_custom_call.1} parent=1 // pred_fallthru
      _
    // Predicated region
    $region14: #{tpu_custom_call.1} parent=1 // pred_check
      _
    $region15: #{tpu_custom_call.1} parent=1 // pred_check_branch
      %45 = sbr.rel (0) target = $region17
    $region16: #{tpu_custom_call.1} parent=1 // pred_region
      %46 = dma.done [#allocation4], 256
    $region17: #{tpu_custom_call.1} parent=1 // pred_fallthru
      _
    %47 = vsyncpa [#allocation3], 1
    %48 = vsyncpa [#allocation4], 1

</llo_original>
